<compile_context>
chip_gen: v6e
topology: v6e:2x2x1
jax: 0.10.0
libtpu: 0.0.40
codegen_flags: <defaults>
</compile_context>

<pallas_src>
import functools

import jax
import jax.numpy as jnp
from jax.experimental import pallas as pl
from jax.experimental.pallas import tpu as pltpu


# ---------------------------------------------------------------------------
# Tile sizing: largest multiple-of-8 row tile whose double-buffered x slab
# fits a conservative VMEM budget (portable across v5e/v6e/v7x scoped limits).
# ---------------------------------------------------------------------------
def _pick_block_batch(n, d, itemsize=4, vmem_budget_bytes=12 * 1024 * 1024,
                      max_rows_cap=8192):
    max_rows = max(8, vmem_budget_bytes // (2 * d * itemsize))  # 2x = double buffer
    max_rows = (max_rows // 8) * 8
    n_pad8 = ((n + 7) // 8) * 8
    return max(8, min(n_pad8, max_rows, max_rows_cap))


def _pad_rows(x, block_batch):
    n = x.shape[0]
    n_pad = pl.cdiv(n, block_batch) * block_batch
    if n_pad != n:
        x = jnp.pad(x, ((0, n_pad - n), (0, 0)))
    return x, n_pad


# ---------------------------------------------------------------------------
# Kernels
# ---------------------------------------------------------------------------
def _ccs_probe_kernel(x_ref, w_ref, o_ref):
    # x_ref: (TB, D)  w_ref: (1, D)  o_ref: (TB, 1)
    # VPU broadcast-multiply + XLU lane reduce (no MXU N=1 matmul).
    logits = jnp.sum(x_ref[...] * w_ref[...], axis=-1, keepdims=True)
    o_ref[...] = jax.nn.sigmoid(logits).astype(o_ref.dtype)


def _ccs_loss_kernel(xp_ref, xn_ref, w_ref, o_ref):
    # Fused: both probe evaluations + per-row CCS loss terms in one pass.
    w = w_ref[...]
    p_pos = jax.nn.sigmoid(jnp.sum(xp_ref[...] * w, axis=-1, keepdims=True))
    p_neg = jax.nn.sigmoid(jnp.sum(xn_ref[...] * w, axis=-1, keepdims=True))
    consistency = (p_pos - (1.0 - p_neg)) ** 2
    confidence = jnp.minimum(p_pos, p_neg) ** 2
    o_ref[...] = (consistency + confidence).astype(o_ref.dtype)


# ---------------------------------------------------------------------------
# Wrappers
# ---------------------------------------------------------------------------
@functools.partial(jax.jit, static_argnames=("block_batch",))
def ccs_probe_forward(x, weight, *, block_batch=None):
    """sigmoid(x @ weight.T).squeeze(-1); weight shaped (1, d_in) like nn.Linear."""
    n, d = x.shape
    if block_batch is None:
        block_batch = _pick_block_batch(n, d)
    w_row = weight.reshape(1, d)
    x_p, n_pad = _pad_rows(x, block_batch)

    out = pl.pallas_call(
        _ccs_probe_kernel,
        out_shape=jax.ShapeDtypeStruct((n_pad, 1), x.dtype),
        grid_spec=pltpu.PrefetchScalarGridSpec(
            num_scalar_prefetch=0,
            grid=(n_pad // block_batch,),
            in_specs=[
                pl.BlockSpec((block_batch, d), lambda i: (i, 0)),
                pl.BlockSpec((1, d), lambda i: (0, 0)),
            ],
            out_specs=pl.BlockSpec((block_batch, 1), lambda i: (i, 0)),
        ),
        compiler_params=pltpu.CompilerParams(
            dimension_semantics=("parallel",),
        ),
    )(x_p, w_row)
    return out[:n, 0]  # drop row padding, squeeze(-1)


@functools.partial(jax.jit, static_argnames=("block_batch",))
def ccs_loss_fused(acts, neg_acts, weight, *, block_batch=None):
    """Fused CCS loss: one pallas_call over both activations; mean in XLA."""
    n, d = acts.shape
    if block_batch is None:
        block_batch = _pick_block_batch(n, d)
    w_row = weight.reshape(1, d)
    acts_p, n_pad = _pad_rows(acts, block_batch)
    neg_p, _ = _pad_rows(neg_acts, block_batch)

    per_row = pl.pallas_call(
        _ccs_loss_kernel,
        out_shape=jax.ShapeDtypeStruct((n_pad, 1), acts.dtype),
        grid_spec=pltpu.PrefetchScalarGridSpec(
            num_scalar_prefetch=0,
            grid=(n_pad // block_batch,),
            in_specs=[
                pl.BlockSpec((block_batch, d), lambda i: (i, 0)),
                pl.BlockSpec((block_batch, d), lambda i: (i, 0)),
                pl.BlockSpec((1, d), lambda i: (0, 0)),
            ],
            out_specs=pl.BlockSpec((block_batch, 1), lambda i: (i, 0)),
        ),
        compiler_params=pltpu.CompilerParams(
            dimension_semantics=("parallel",),
        ),
    )(acts_p, neg_p, w_row)
    return jnp.mean(per_row[:n, 0])  # padded rows excluded from the mean


def ccs_loss(probe_fn, acts, neg_acts):
    """Unfused mirror of the PyTorch ccs_loss (plain JAX glue, for checking)."""
    p_pos = probe_fn(acts)
    p_neg = probe_fn(neg_acts)
    consistency = (p_pos - (1.0 - p_neg)) ** 2
    confidence = jnp.minimum(p_pos, p_neg) ** 2
    return jnp.mean(consistency + confidence)


# TODO(synk): CCSProbe.from_data (AdamW training loop) is host-side training
# logic, not a kernel; it would be plain JAX/optax glue around these kernels.

if __name__ == "__main__":
    key = jax.random.PRNGKey(0)
    k_x, k_nx, k_w = jax.random.split(key, 3)

    batch, d_in = 16, 32
    acts = jax.random.normal(k_x, (batch, d_in), dtype=jnp.float32)
    neg_acts = jax.random.normal(k_nx, (batch, d_in), dtype=jnp.float32)
    # Deterministic init of nn.Linear(d_in, 1, bias=False) weight: (1, d_in)
    weight = jax.random.normal(k_w, (1, d_in), dtype=jnp.float32) / jnp.sqrt(d_in)

    # ---- Forward pass (CCSProbe.forward equivalent) ----
    p = jax.block_until_ready(ccs_probe_forward(acts, weight))
    ref = jax.nn.sigmoid(acts @ weight.T)[:, 0]
    assert p.shape == (batch,)
    assert jnp.allclose(p, ref, atol=1e-5, rtol=1e-5)

    # ---- Ragged-batch path (padding + pl.cdiv handling) ----
    acts_ragged = acts[:13]
    p_r = jax.block_until_ready(ccs_probe_forward(acts_ragged, weight))
    ref_r = jax.nn.sigmoid(acts_ragged @ weight.T)[:, 0]
    assert p_r.shape == (13,)
    assert jnp.allclose(p_r, ref_r, atol=1e-5, rtol=1e-5)

    # ---- Fused ccs_loss vs unfused / pure-JAX reference ----
    loss_fused = jax.block_until_ready(ccs_loss_fused(acts, neg_acts, weight))
    probe_fn = lambda x: ccs_probe_forward(x, weight)
    loss_unfused = jax.block_until_ready(ccs_loss(probe_fn, acts, neg_acts))
    ref_pos = jax.nn.sigmoid(acts @ weight.T)[:, 0]
    ref_neg = jax.nn.sigmoid(neg_acts @ weight.T)[:, 0]
    loss_ref = jnp.mean((ref_pos - (1.0 - ref_neg)) ** 2
                        + jnp.minimum(ref_pos, ref_neg) ** 2)
    assert loss_fused.shape == ()
    assert jnp.allclose(loss_fused, loss_ref, atol=1e-5, rtol=1e-5)
    assert jnp.allclose(loss_unfused, loss_ref, atol=1e-5, rtol=1e-5)

    print("KERNEL_OK")
</pallas_src>

<mosaic_0001>
module attributes {stable_mosaic.version = 11 : i64} {
  func.func @_ccs_probe_kernel(%arg0: i32, %arg1: memref<16x32xf32, #tpu.memory_space<vmem>>, %arg2: memref<1x32xf32, #tpu.memory_space<vmem>>, %arg3: memref<16x1xf32, #tpu.memory_space<vmem>>) attributes {dimension_semantics = [#tpu.dimension_semantics<parallel>], iteration_bounds = array<i64: 1>, scalar_prefetch = 0 : i64, scratch_operands = 0 : i64, tpu.core_type = #tpu.core_type<tc>, window_params = [{transform_indices = @transform_0, window_bounds = array<i64: 16, 32>}, {pipeline_mode = #tpu.pipeline_mode<synchronous>, transform_indices = @transform_1, window_bounds = array<i64: 1, 32>}, {transform_indices = @transform_2, window_bounds = array<i64: 16, 1>}]} {
    %c0 = arith.constant 0 : index
    %c0_0 = arith.constant 0 : index
    %0 = vector.load %arg1[%c0, %c0_0] : memref<16x32xf32, #tpu.memory_space<vmem>>, vector<16x32xf32>
    %c0_1 = arith.constant 0 : index
    %c0_2 = arith.constant 0 : index
    %1 = vector.load %arg2[%c0_1, %c0_2] : memref<1x32xf32, #tpu.memory_space<vmem>>, vector<1x32xf32>
    %2 = vector.broadcast %1 : vector<1x32xf32> to vector<16x32xf32>
    %3 = arith.mulf %0, %2 : vector<16x32xf32>
    %cst = arith.constant dense<0.000000e+00> : vector<16xf32>
    %4 = vector.multi_reduction <add>, %3, %cst [1] : vector<16x32xf32> to vector<16xf32>
    %5 = vector.shape_cast %4 : vector<16xf32> to vector<16x1xf32>
    %6 = arith.negf %5 : vector<16x1xf32>
    %7 = math.exp %6 : vector<16x1xf32>
    %cst_3 = arith.constant 1.000000e+00 : f32
    %8 = vector.broadcast %cst_3 : f32 to vector<16x1xf32>
    %9 = arith.addf %8, %7 : vector<16x1xf32>
    %10 = arith.divf %8, %9 : vector<16x1xf32>
    %c0_4 = arith.constant 0 : index
    %c0_5 = arith.constant 0 : index
    %11 = vector.load %arg3[%c0_4, %c0_5] : memref<16x1xf32, #tpu.memory_space<vmem>>, vector<16x1xf32>
    tpu.vector_store %arg3[%c0_4, %c0_5], %10 {strides = array<i32>} : memref<16x1xf32, #tpu.memory_space<vmem>>, vector<16x1xf32>,
    return
  }
  func.func @transform_0(%arg0: i32) -> (i32, i32) {
    %c0_i32 = arith.constant 0 : i32
    %c0_i32_0 = arith.constant 0 : i32
    return %arg0, %c0_i32 : i32, i32
  }
  func.func @transform_1(%arg0: i32) -> (i32, i32) {
    %c0_i32 = arith.constant 0 : i32
    %c0_i32_0 = arith.constant 0 : i32
    %c0_i32_1 = arith.constant 0 : i32
    return %c0_i32, %c0_i32_0 : i32, i32
  }
  func.func @transform_2(%arg0: i32) -> (i32, i32) {
    %c0_i32 = arith.constant 0 : i32
    %c0_i32_0 = arith.constant 0 : i32
    return %arg0, %c0_i32 : i32, i32
  }
}

</mosaic_0001>

<llo_original>
// kernel: ccs_probe_forward.1
$region0: #{ccs_probe_forward.1}
  #allocation0 [shape = 'u32[]', space=smem, size = 0x4, offset = 0x4, fixed_abs, tag = 'smem constant byte address 0x4 - core index']
  #allocation1 [shape = 'u32[144,128]{1,0:T(1,128)}', space=vmem, size = 0x12000, scoped, tag = 'internal scratch']
  %s0 = inlined_call_operand.hbm [shape: f32[16,32], index: 0, kind: input, shape index: {}]
  %s1 = inlined_call_operand.vmem [shape: f32[1,32], index: 1, kind: input, shape index: {}]
  %s2 = inlined_call_operand.vmem [shape: f32[16,1], index: 2, kind: output, shape index: {}]
  %s3 = sld [smem:[#allocation0]]
  $region22: #{ccs_probe_forward.1} parent=0
    _
  %s5 = ssub.s32 1, %s3
  %s6 = scalar_select 0, %s5, %s3
  $region1: #{ccs_probe_forward.1} parent=0
    #allocation2 [shape = 'u8[8192]{0}', space=vmem, size = 0x2000, scoped, tag = 'input window, operand 0, single buffered']
    #allocation3 [shape = 's32[1]{0}', space=sflag, size = 0x4, scoped, tag = 'scoped memory for ccs_probe_forward.1']
    %7 = vsyncpa [#allocation3], 0
    // Predicated region
    $region2: #{ccs_probe_forward.1} parent=1 // pred_check
      _
    $region3: #{ccs_probe_forward.1} parent=1 // pred_check_branch
      %9 = sbr.rel (0) target = $region5
    $region4: #{ccs_probe_forward.1} parent=1 // pred_region
      %s11 = ssub.s32 256, 256
      %12 = vsyncadd [#allocation3], %s11
      %s13 = sshll.u32 [#allocation2], 4
      %s14 = int_to_ptr.vmem [resolvable:$true] %s13
      %19 = dma.hbm_to_vmem [thread:$0]  %s0, 256, %s14, [#allocation3], 128, 128, 8
    $region5: #{ccs_probe_forward.1} parent=1 // pred_fallthru
      _
    // Predicated region
    $region6: #{ccs_probe_forward.1} parent=1 // pred_check
      _
    $region7: #{ccs_probe_forward.1} parent=1 // pred_check_branch
      %21 = sbr.rel (0) target = $region9
    $region8: #{ccs_probe_forward.1} parent=1 // pred_region
      _
    $region9: #{ccs_probe_forward.1} parent=1 // pred_fallthru
      _
    // Predicated region
    $region10: #{ccs_probe_forward.1} parent=1 // pred_check
      _
    $region11: #{ccs_probe_forward.1} parent=1 // pred_check_branch
      %23 = sbr.rel (0) target = $region13
    $region12: #{ccs_probe_forward.1} parent=1 // pred_region
      %24 = dma.done [#allocation3], 256
    $region13: #{ccs_probe_forward.1} parent=1 // pred_fallthru
      _
    %v25 = vld [vmem:[#allocation2] sm:$0xff]
    %v26 = vld [vmem:[#allocation2 + $0x8] sm:$0xff]
    %v27 = vld [vmem:[%s1] sm:$0x1]
    %v29 = vlaneseq
    %v30 = vshrl.u32 %v29, 7
    %v31 = vsub.s32 0, %v30
    %v32 = vrot.slane %v27, %v31
    %v34 = vmul.f32 %v25, %v32
    %v35 = vmul.f32 %v26, %v32
    %vm36 = vcmask 261120
    %v37 = vsel %vm36, %v34, 0.0
    %38 = vadd.xlane.f32.xlu0 %v37
    %v39 = vpop.xlane.xlu0 %38
    %v40 = vsel %vm36, %v35, 0.0
    %41 = vadd.xlane.f32.xlu0 %v40
    %v42 = vpop.xlane.xlu0 %41
    %v43 = vxor.u32 %v39, 2147483648
    %v44 = vxor.u32 %v42, 2147483648
    %v45 = vmul.f32 %v43, 1.442695
    %v46 = vpow.pop %v45
    %v47 = vmul.f32 %v44, 1.442695
    %v48 = vpow.pop %v47
    %v49 = vadd.f32 %v46, 1.0
    %v50 = vadd.f32 %v48, 1.0
    %v51 = vrcp.pop %v49
    %v52 = vmul.f32 1.0, %v51
    %v53 = vrcp.pop %v50
    %v54 = vmul.f32 1.0, %v53
    %vm55 = vcmask 7168
    %56 = vst.msk [vmem:[%s2] sm:$0xff] %vm55, %v52
    %57 = vst.msk [vmem:[%s2 + $0x8] sm:$0xff] %vm55, %v54
    // Predicated region
    $region14: #{ccs_probe_forward.1} parent=1 // pred_check
      _
    $region15: #{ccs_probe_forward.1} parent=1 // pred_check_branch
      %59 = sbr.rel (0) target = $region17
    $region16: #{ccs_probe_forward.1} parent=1 // pred_region
      _
    $region17: #{ccs_probe_forward.1} parent=1 // pred_fallthru
      _
    // Predicated region
    $region18: #{ccs_probe_forward.1} parent=1 // pred_check
      _
    $region19: #{ccs_probe_forward.1} parent=1 // pred_check_branch
      %61 = sbr.rel (0) target = $region21
    $region20: #{ccs_probe_forward.1} parent=1 // pred_region
      _
    $region21: #{ccs_probe_forward.1} parent=1 // pred_fallthru
      _
    %62 = vsyncpa [#allocation3], 1

</llo_original>
